<compile_context>
chip_gen: v7x
topology: tpu7x:2x2x1
jax: 0.10.0
libtpu: 0.0.40
codegen_flags: <defaults>
</compile_context>

<pallas_src>
import numpy as np
import jax
import jax.numpy as jnp
from jax.experimental import pallas as pl
from jax.experimental.pallas import tpu as pltpu


_MIN_DMA_RUN_BYTES = 512   # below this per-row contiguous run, strided HBM DMA
                           # degenerates into descriptor-rate-bound tiny bursts
_TINY_TOTAL_BYTES = 1024   # below this, kernel launch overhead > copy cost

_unaligned_dma_ok = None   # lazily probed once per process


def _vmem_capacity_bytes():
    """Physical VMEM per core; conservative 64 MiB (v7x) if the query fails."""
    try:
        info = pltpu.get_tpu_info()
        cap = getattr(info, "vmem_capacity_bytes", None)
        if cap:
            return int(cap)
    except Exception:
        pass
    return 64 << 20


def _dma_concat_2d(xs2d, sizes, out_shape2d, axis):
    """HBM->HBM DMA concat of 2D arrays along `axis` (no VMEM staging).

    Inputs and output stay in HBM (memory_space=pl.ANY); the kernel issues one
    async copy per input into its static slice of the output.  All copies are
    started before any wait so they overlap on the DMA engines.
    """
    n = len(xs2d)
    dtype = xs2d[0].dtype

    offsets = []
    off = 0
    for sz in sizes:
        offsets.append(off)
        off += sz

    def kernel(*refs):
        *in_refs, out_ref, sem = refs
        copies = []
        for k, (r, o, sz) in enumerate(zip(in_refs, offsets, sizes)):
            dst = out_ref.at[o:o + sz, :] if axis == 0 else out_ref.at[:, o:o + sz]
            copies.append(pltpu.make_async_copy(r, dst, sem.at[k]))
        for c in copies:   # launch every DMA; they overlap on the DMA engines
            c.start()
        for c in copies:
            c.wait()

    # TODO(synk): on v7x (2 TCs/chip) shard the row range across both
    # TensorCores (grid axis of 2 marked "parallel") if a single core's DMA
    # issue rate ever limits the 3.2 TB/s roofline; with a handful of large
    # copies the descriptor rate is nowhere near the bottleneck.
    return pl.pallas_call(
        kernel,
        out_shape=jax.ShapeDtypeStruct(out_shape2d, dtype),
        in_specs=[pl.BlockSpec(memory_space=pl.ANY) for _ in xs2d],
        out_specs=pl.BlockSpec(memory_space=pl.ANY),
        scratch_shapes=[pltpu.SemaphoreType.DMA((n,))],
        compiler_params=pltpu.CompilerParams(has_side_effects=True),
    )(*xs2d)


def _unaligned_minor_dma_supported():
    """One-time probe (validate-once, per the review): does Mosaic accept an
    HBM destination slice whose minor-axis offset/width are not 128-lane
    aligned for make_async_copy, and does it produce correct data?"""
    global _unaligned_dma_ok
    if _unaligned_dma_ok is None:
        try:
            a = jnp.arange(8 * 136, dtype=jnp.float32).reshape(8, 136)
            b = jnp.arange(8 * 72, dtype=jnp.float32).reshape(8, 72) + 0.5
            out = _dma_concat_2d([a, b], [136, 72], (8, 208), axis=1)
            ref = jnp.concatenate([a, b], axis=-1)
            _unaligned_dma_ok = bool(jnp.array_equal(out, ref))
        except Exception:
            _unaligned_dma_ok = False
    return _unaligned_dma_ok


def _tiled_vmem_concat_2d(xs2d, sizes, out_cols):
    """Fallback: grid-tiled, double-buffered VMEM copy with a lane-dense output
    block.  Only reached for narrow per-row slabs (< _MIN_DMA_RUN_BYTES) or if
    the unaligned-DMA probe fails; wide slabs always take the DMA path."""
    rows = int(xs2d[0].shape[0])
    dtype = xs2d[0].dtype
    itemsize = int(np.dtype(dtype).itemsize)
    pack = max(8, 32 // itemsize)   # sublane pack: 8 f32 / 16 bf16 / 32 int8

    phys = _vmem_capacity_bytes()
    # Target total tile footprint (inputs + output blocks, double buffered):
    # big tiles amortize the ~0.35 us per-grid-step overhead; cap well under
    # physical VMEM (-> ~32 MiB on 128-MiB v5e/v6e, ~24 MiB on 64-MiB v7x).
    budget = min(32 << 20, max(4 << 20, phys // 2 - (8 << 20)))
    tr = budget // (4 * out_cols * itemsize)
    if tr >= rows:
        tr = rows
    else:
        tr = max(pack, (tr // pack) * pack)
        tr = min(tr, rows)

    # TODO(synk): for pathological out_cols where even tr == pack overflows
    # VMEM, the column axis would also need tiling.
    footprint = 4 * tr * out_cols * itemsize
    vmem_limit = int(max(16 << 20, min(phys - (2 << 20), footprint + (8 << 20))))

    grid = (pl.cdiv(rows, tr),)

    def kernel(*refs):
        *in_refs, out_ref = refs
        off = 0
        for r, sz in zip(in_refs, sizes):
            out_ref[:, off:off + sz] = r[...]
            off += sz

    return pl.pallas_call(
        kernel,
        out_shape=jax.ShapeDtypeStruct((rows, out_cols), dtype),
        grid=grid,
        in_specs=[pl.BlockSpec((tr, sz), lambda i: (i, 0)) for sz in sizes],
        out_specs=pl.BlockSpec((tr, out_cols), lambda i: (i, 0)),
        compiler_params=pltpu.CompilerParams(
            dimension_semantics=("parallel",),
            vmem_limit_bytes=vmem_limit,
        ),
    )(*xs2d)


def pallas_concat(xs, dimension=1):
    """Concatenate equal-rank arrays along `dimension` (mirrors torch.cat(x, d))."""
    xs = list(xs)
    if not xs:
        raise ValueError("Concat requires at least one input tensor")
    if len(xs) == 1:
        return xs[0]

    ndim = xs[0].ndim
    d = dimension % ndim

    # torch.cat applies type promotion across mixed input dtypes.
    out_dtype = jnp.result_type(*xs)
    xs = [x if x.dtype == out_dtype else x.astype(out_dtype) for x in xs]

    shape0 = tuple(int(s) for s in xs[0].shape)
    for x in xs[1:]:
        if x.ndim != ndim or any(
            int(x.shape[a]) != shape0[a] for a in range(ndim) if a != d
        ):
            raise ValueError("All inputs must match on non-concat dimensions")

    total_d = sum(int(x.shape[d]) for x in xs)
    out_shape = list(shape0)
    out_shape[d] = total_d
    out_shape = tuple(out_shape)

    # Drop empty slabs (torch.cat allows zero-size operands).
    xs = [x for x in xs if int(x.shape[d]) > 0]
    if not xs:
        return jnp.zeros(out_shape, out_dtype)
    if len(xs) == 1:
        return xs[0].reshape(out_shape)

    pre = 1
    for s in shape0[:d]:
        pre *= s
    post = 1
    for s in shape0[d + 1:]:
        post *= s

    concat_sizes = [int(x.shape[d]) for x in xs]
    itemsize = int(np.dtype(out_dtype).itemsize)
    total_bytes = pre * total_d * post * itemsize

    # Tiny / degenerate concats: fixed launch + DMA setup overhead dominates.
    if total_bytes <= _TINY_TOTAL_BYTES:
        return jnp.concatenate(xs, axis=d)

    if pre == 1:
        # Concat along the leading (effective) dim: every input is one fully
        # contiguous HBM block -> always DMA into row slices of the output.
        xs2d = [x.reshape(sz, post) for x, sz in zip(xs, concat_sizes)]
        out2d = _dma_concat_2d(xs2d, concat_sizes, (total_d, post), axis=0)
        return out2d.reshape(out_shape)

    # Lane-dense 2D views: (pre, C_i * post); concat along the minor axis.
    xs2d = [x.reshape(pre, sz * post) for x, sz in zip(xs, concat_sizes)]
    sizes2d = [sz * post for sz in concat_sizes]
    out_cols = total_d * post
    min_run_bytes = min(sizes2d) * itemsize

    use_dma = False
    if min_run_bytes >= _MIN_DMA_RUN_BYTES or pre <= 8:
        if all(sz % 128 == 0 for sz in sizes2d):
            use_dma = True                      # lane-aligned: known-good DMA
        elif _unaligned_minor_dma_supported():
            use_dma = True                      # probed once: unaligned DMA OK

    if use_dma:
        out2d = _dma_concat_2d(xs2d, sizes2d, (pre, out_cols), axis=1)
    else:
        out2d = _tiled_vmem_concat_2d(xs2d, sizes2d, out_cols)
    return out2d.reshape(out_shape)


class Concat:
    """JAX/Pallas port of the PyTorch Concat module (no parameters)."""

    def __init__(self, dimension=1):
        self.d = dimension

    def __call__(self, x):
        return pallas_concat(x, self.d)


if __name__ == "__main__":
    key = jax.random.PRNGKey(0)
    keys = jax.random.split(key, 8)

    cases = []
    # 1) NCHW channel concat, 128-lane-aligned slabs -> direct HBM->HBM DMA path.
    cases.append(([
        jax.random.normal(keys[0], (2, 4, 16, 16), dtype=jnp.float32),
        jax.random.normal(keys[1], (2, 6, 16, 16), dtype=jnp.float32),
        jax.random.normal(keys[2], (2, 2, 16, 16), dtype=jnp.float32)], 1))
    # 2) last-dim concat with tiny per-row runs -> tiled VMEM fallback.
    cases.append(([
        jax.random.normal(keys[3], (2, 4, 16, 5), dtype=jnp.float32),
        jax.random.normal(keys[4], (2, 4, 16, 3), dtype=jnp.float32)], 3))
    # 3) unaligned-but-wide slabs -> probed unaligned DMA (or safe fallback).
    cases.append(([
        jax.random.normal(keys[5], (2, 3, 8, 20), dtype=jnp.float32),
        jax.random.normal(keys[6], (2, 5, 8, 20), dtype=jnp.float32)], 1))
    # 4) dim-0 concat (pre == 1) -> contiguous-block row-slice DMA path.
    cases.append(([
        jax.random.normal(keys[7], (3, 4, 8, 8), dtype=jnp.float32),
        jax.random.normal(keys[0], (2, 4, 8, 8), dtype=jnp.float32)], 0))
    # 5) bf16 fallback (sublane pack 16).
    cases.append(([
        jax.random.normal(keys[1], (2, 4, 16, 6), dtype=jnp.bfloat16),
        jax.random.normal(keys[2], (2, 4, 16, 2), dtype=jnp.bfloat16)], 3))
    # 6) mixed-dtype inputs -> promotion like torch.cat.
    cases.append(([
        jax.random.normal(keys[3], (2, 4, 16, 6), dtype=jnp.bfloat16),
        jax.random.normal(keys[4], (2, 4, 16, 2), dtype=jnp.float32)], 3))

    for xs, dim in cases:
        module = Concat(dimension=dim)
        out = jax.block_until_ready(module(xs))
        cast_dtype = jnp.result_type(*xs)
        ref = jnp.concatenate([x.astype(cast_dtype) for x in xs], axis=dim)
        assert out.shape == ref.shape, (out.shape, ref.shape)
        assert out.dtype == ref.dtype, (out.dtype, ref.dtype)
        assert jnp.array_equal(out, ref), f"Pallas concat mismatch (dim={dim})"

    print("KERNEL_OK")
</pallas_src>

<mosaic_0001>
module attributes {stable_mosaic.version = 11 : i64} {
  func.func @kernel(%arg0: memref<2x1024xf32, #tpu.memory_space<any>>, %arg1: memref<2x1536xf32, #tpu.memory_space<any>>, %arg2: memref<2x512xf32, #tpu.memory_space<any>>, %arg3: memref<2x3072xf32, #tpu.memory_space<any>>, %arg4: memref<3x!tpu.dma_semaphore, #tpu.memory_space<semaphore_mem>>) attributes {dimension_semantics = [], scalar_prefetch = 0 : i64, scratch_operands = 1 : i64, tpu.core_type = #tpu.core_type<tc>} {
    %c0_i32 = arith.constant 0 : i32
    %c0_i32_0 = arith.constant 0 : i32
    %c0_i32_1 = arith.constant 0 : i32
    %0 = tpu.memref_slice %arg3[%c0_i32_0, %c0_i32_1] : memref<2x3072xf32, #tpu.memory_space<any>> -> memref<2x1024xf32, #tpu.memory_space<any>>
    %1 = tpu.memref_slice %arg4[%c0_i32] : memref<3x!tpu.dma_semaphore, #tpu.memory_space<semaphore_mem>> -> memref<1x!tpu.dma_semaphore, #tpu.memory_space<semaphore_mem>>
    %2 = tpu.memref_squeeze %1 : memref<1x!tpu.dma_semaphore, #tpu.memory_space<semaphore_mem>> -> memref<!tpu.dma_semaphore, #tpu.memory_space<semaphore_mem>>
    tpu.enqueue_dma source(%arg0 : memref<2x1024xf32, #tpu.memory_space<any>>) target(%0 : memref<2x1024xf32, #tpu.memory_space<any>>) target_semaphore(%2 : memref<!tpu.dma_semaphore, #tpu.memory_space<semaphore_mem>>)
    %c1_i32 = arith.constant 1 : i32
    %c0_i32_2 = arith.constant 0 : i32
    %c1024_i32 = arith.constant 1024 : i32
    %3 = tpu.memref_slice %arg3[%c0_i32_2, %c1024_i32] : memref<2x3072xf32, #tpu.memory_space<any>> -> memref<2x1536xf32, #tpu.memory_space<any>>
    %4 = tpu.memref_slice %arg4[%c1_i32] : memref<3x!tpu.dma_semaphore, #tpu.memory_space<semaphore_mem>> -> memref<1x!tpu.dma_semaphore, #tpu.memory_space<semaphore_mem>>
    %5 = tpu.memref_squeeze %4 : memref<1x!tpu.dma_semaphore, #tpu.memory_space<semaphore_mem>> -> memref<!tpu.dma_semaphore, #tpu.memory_space<semaphore_mem>>
    tpu.enqueue_dma source(%arg1 : memref<2x1536xf32, #tpu.memory_space<any>>) target(%3 : memref<2x1536xf32, #tpu.memory_space<any>>) target_semaphore(%5 : memref<!tpu.dma_semaphore, #tpu.memory_space<semaphore_mem>>)
    %c2_i32 = arith.constant 2 : i32
    %c0_i32_3 = arith.constant 0 : i32
    %c2560_i32 = arith.constant 2560 : i32
    %6 = tpu.memref_slice %arg3[%c0_i32_3, %c2560_i32] : memref<2x3072xf32, #tpu.memory_space<any>> -> memref<2x512xf32, #tpu.memory_space<any>>
    %7 = tpu.memref_slice %arg4[%c2_i32] : memref<3x!tpu.dma_semaphore, #tpu.memory_space<semaphore_mem>> -> memref<1x!tpu.dma_semaphore, #tpu.memory_space<semaphore_mem>>
    %8 = tpu.memref_squeeze %7 : memref<1x!tpu.dma_semaphore, #tpu.memory_space<semaphore_mem>> -> memref<!tpu.dma_semaphore, #tpu.memory_space<semaphore_mem>>
    tpu.enqueue_dma source(%arg2 : memref<2x512xf32, #tpu.memory_space<any>>) target(%6 : memref<2x512xf32, #tpu.memory_space<any>>) target_semaphore(%8 : memref<!tpu.dma_semaphore, #tpu.memory_space<semaphore_mem>>)
    %c0_i32_4 = arith.constant 0 : i32
    %c0_i32_5 = arith.constant 0 : i32
    %c0_i32_6 = arith.constant 0 : i32
    %9 = tpu.memref_slice %arg3[%c0_i32_5, %c0_i32_6] : memref<2x3072xf32, #tpu.memory_space<any>> -> memref<2x1024xf32, #tpu.memory_space<any>>
    %10 = tpu.memref_slice %arg4[%c0_i32_4] : memref<3x!tpu.dma_semaphore, #tpu.memory_space<semaphore_mem>> -> memref<1x!tpu.dma_semaphore, #tpu.memory_space<semaphore_mem>>
    %11 = tpu.memref_squeeze %10 : memref<1x!tpu.dma_semaphore, #tpu.memory_space<semaphore_mem>> -> memref<!tpu.dma_semaphore, #tpu.memory_space<semaphore_mem>>
    tpu.wait_dma2 semaphore(%11 : memref<!tpu.dma_semaphore, #tpu.memory_space<semaphore_mem>>) src(%arg0 : memref<2x1024xf32, #tpu.memory_space<any>>) dst(%9 : memref<2x1024xf32, #tpu.memory_space<any>>)
    %c1_i32_7 = arith.constant 1 : i32
    %c0_i32_8 = arith.constant 0 : i32
    %c1024_i32_9 = arith.constant 1024 : i32
    %12 = tpu.memref_slice %arg3[%c0_i32_8, %c1024_i32_9] : memref<2x3072xf32, #tpu.memory_space<any>> -> memref<2x1536xf32, #tpu.memory_space<any>>
    %13 = tpu.memref_slice %arg4[%c1_i32_7] : memref<3x!tpu.dma_semaphore, #tpu.memory_space<semaphore_mem>> -> memref<1x!tpu.dma_semaphore, #tpu.memory_space<semaphore_mem>>
    %14 = tpu.memref_squeeze %13 : memref<1x!tpu.dma_semaphore, #tpu.memory_space<semaphore_mem>> -> memref<!tpu.dma_semaphore, #tpu.memory_space<semaphore_mem>>
    tpu.wait_dma2 semaphore(%14 : memref<!tpu.dma_semaphore, #tpu.memory_space<semaphore_mem>>) src(%arg1 : memref<2x1536xf32, #tpu.memory_space<any>>) dst(%12 : memref<2x1536xf32, #tpu.memory_space<any>>)
    %c2_i32_10 = arith.constant 2 : i32
    %c0_i32_11 = arith.constant 0 : i32
    %c2560_i32_12 = arith.constant 2560 : i32
    %15 = tpu.memref_slice %arg3[%c0_i32_11, %c2560_i32_12] : memref<2x3072xf32, #tpu.memory_space<any>> -> memref<2x512xf32, #tpu.memory_space<any>>
    %16 = tpu.memref_slice %arg4[%c2_i32_10] : memref<3x!tpu.dma_semaphore, #tpu.memory_space<semaphore_mem>> -> memref<1x!tpu.dma_semaphore, #tpu.memory_space<semaphore_mem>>
    %17 = tpu.memref_squeeze %16 : memref<1x!tpu.dma_semaphore, #tpu.memory_space<semaphore_mem>> -> memref<!tpu.dma_semaphore, #tpu.memory_space<semaphore_mem>>
    tpu.wait_dma2 semaphore(%17 : memref<!tpu.dma_semaphore, #tpu.memory_space<semaphore_mem>>) src(%arg2 : memref<2x512xf32, #tpu.memory_space<any>>) dst(%15 : memref<2x512xf32, #tpu.memory_space<any>>)
    return
  }
}

</mosaic_0001>

<llo_original>
// kernel: tpu_custom_call.1
$region0: #{tpu_custom_call.1}
  #allocation0 [shape = 'u32[]', space=smem, size = 0x4, offset = 0x4, fixed_abs, tag = 'smem constant byte address 0x4 - core index']
  #allocation1 [shape = 'u32[144,128]{1,0:T(1,128)}', space=vmem, size = 0x12000, scoped, tag = 'internal scratch']
  #allocation2 [shape = 's32[3]{0}', space=sflag, size = 0xc, scoped, tag = 'scratch operand']
  #allocation3 [shape = 's32[]', space=sflag, size = 0x4, offset = 0, fixed_abs, tag = 'sflag constant byte address 0x0 - dummy sync flag']
  #allocation4 [shape = 'u32[0]{0}', space=smem, size = 0, offset = 0, fixed_abs, tag = 'smem constant byte address 0x0 - null']
  #allocation5 [shape = 's32[]', space=sflag, size = 0x4, offset = 0, fixed_abs, tag = 'sflag constant byte address 0x0 - dummy sync flag']
  #allocation6 [shape = 'u32[0]{0}', space=smem, size = 0, offset = 0, fixed_abs, tag = 'smem constant byte address 0x0 - null']
  #allocation7 [shape = 's32[]', space=sflag, size = 0x4, offset = 0, fixed_abs, tag = 'sflag constant byte address 0x0 - dummy sync flag']
  #allocation8 [shape = 'u32[0]{0}', space=smem, size = 0, offset = 0, fixed_abs, tag = 'smem constant byte address 0x0 - null']
  %s0 = inlined_call_operand.hbm [shape: f32[2,1024], index: 0, kind: input, shape index: {}]
  %s1 = inlined_call_operand.hbm [shape: f32[2,1536], index: 1, kind: input, shape index: {}]
  %s2 = inlined_call_operand.hbm [shape: f32[2,512], index: 2, kind: input, shape index: {}]
  %s3 = inlined_call_operand.hbm [shape: f32[2,3072], index: 3, kind: output, shape index: {}]
  %s4 = sld [smem:[#allocation0]]
  $region2: #{tpu_custom_call.1} parent=0
    _
  %s6 = ssub.s32 1, %s4
  %s7 = scalar_select 0, %s6, %s4
  %s9 = sshll.u32 1, 14
  %s10 = sxor.u32 4294967295, %s9
  %s13 = sshll.u32 3, 24
  %s14 = sxor.u32 4294967295, %s13
  %s15 = sand.u32 0, %s14
  %s17 = sor.u32 %s15, 0
  %20 = dma.general %s0, 256, %s3, [#allocation2], [#allocation3], [#allocation4], %s17, 0
  %s21 = scalar_lea.hbm %s3, 256
  %s22 = scalar_lea.sflag [#allocation2], 1
  %s24 = sshll.u32 1, 14
  %s25 = sxor.u32 4294967295, %s24
  %s28 = sshll.u32 3, 24
  %s29 = sxor.u32 4294967295, %s28
  %s30 = sand.u32 0, %s29
  %s32 = sor.u32 %s30, 0
  %35 = dma.general %s1, 384, %s21, %s22, [#allocation5], [#allocation6], %s32, 0
  %s36 = scalar_lea.hbm %s3, 640
  %s37 = scalar_lea.sflag [#allocation2], 2
  %s39 = sshll.u32 1, 14
  %s40 = sxor.u32 4294967295, %s39
  %s43 = sshll.u32 3, 24
  %s44 = sxor.u32 4294967295, %s43
  %s45 = sand.u32 0, %s44
  %s47 = sor.u32 %s45, 0
  %50 = dma.general %s2, 128, %s36, %s37, [#allocation7], [#allocation8], %s47, 0
  %s51 = smul.u32 2, 1
  %s52 = smul.u32 %s51, 8
  %s53 = sshll.u32 %s52, 4
  %54 = dma.done [#allocation2], %s53
  %s55 = smul.u32 %s51, 12
  %s56 = sshll.u32 %s55, 4
  %57 = dma.done %s22, %s56
  %s58 = smul.u32 %s51, 4
  %s59 = sshll.u32 %s58, 4
  %60 = dma.done %s37, %s59
  %61 = vsyncmov [#allocation2]
  %s62 = vpop.sfrf %61
  %p63 = scmp.eq.s32.totalorder %s62, 0
  %p64 = pneg %p63
  %66 = shalt.err (%p64)
  %s67 = scalar_lea.sflag [#allocation2], 1
  %68 = vsyncmov %s67
  %s69 = vpop.sfrf %68
  %p70 = scmp.eq.s32.totalorder %s69, 0
  %p71 = pneg %p70
  %73 = shalt.err (%p71)
  %s74 = scalar_lea.sflag [#allocation2], 2
  %75 = vsyncmov %s74
  %s76 = vpop.sfrf %75
  %p77 = scmp.eq.s32.totalorder %s76, 0
  %p78 = pneg %p77
  %80 = shalt.err (%p78)

</llo_original>
